<compile_context>
chip_gen: v7x
topology: tpu7x:2x2x1
jax: 0.10.0
libtpu: 0.0.40
codegen_flags: <defaults>
</compile_context>

<pallas_src>
import functools

import jax
import jax.numpy as jnp
from jax import lax
from jax.experimental import pallas as pl
from jax.experimental.pallas import tpu as pltpu


def _round_up(x, m):
    return ((x + m - 1) // m) * m


def _tile_byte_budget():
    """Per-input-stream tile budget: 2 MiB on v6e/v7x, 1 MiB elsewhere (v5e et al.)."""
    try:
        kind = jax.devices()[0].device_kind.lower()
    except Exception:
        kind = ""
    if ("v6" in kind) or ("v7" in kind):
        return 2 << 20
    return 1 << 20


def _pad_batch(x, b_pad):
    """Zero-pad only the batch dimension (cheap, usually a no-op)."""
    if x.shape[0] == b_pad:
        return x
    return jnp.pad(x, ((0, b_pad - x.shape[0]), (0, 0)))


def _fold_lane_groups(v):
    """(block_b, block_t) -> (block_b, 128) partial sums.

    Lane-aligned static slices + plain adds: VPU-only, no per-step cross-lane
    reduce and no full-tile accumulator read-modify-write.
    """
    block_t = v.shape[-1]
    s = v[:, 0:128]
    for g in range(1, block_t // 128):
        s = s + v[:, g * 128:(g + 1) * 128]
    return s


# ----------------------------------------------------------------------------
# Kernel 1:  inv_masep[b] = divide_no_nan(1, mean_t |x[b,t] - x[b,t-freq]|)
# insample is read from HBM once; the lag is formed with pltpu.roll + a
# previous-tile carry scratch.  Ragged tails / the first `freq` columns are
# masked with an iota column mask.
# ----------------------------------------------------------------------------
def _masep_inv_kernel(x_ref, inv_ref, acc_ref, carry_ref, *,
                      freq, t_in, block_t, inv_count):
    j = pl.program_id(1)

    @pl.when(j == 0)
    def _init():
        acc_ref[...] = jnp.zeros_like(acc_ref)

    x = x_ref[...].astype(jnp.float32)

    # lagged[:, c] = insample[:, gcol - freq]
    #   c >= freq : current tile, via roll          (XLU slot, idle here)
    #   c <  freq : previous tile, via rolled carry
    rolled = pltpu.roll(x, shift=freq, axis=1)
    prev_rolled = pltpu.roll(carry_ref[...], shift=freq, axis=1)

    col = lax.broadcasted_iota(jnp.int32, x.shape, 1)
    gcol = j * block_t + col
    lagged = jnp.where(col < freq, prev_rolled, rolled)

    d = jnp.abs(x - lagged)
    # Valid lag positions: freq <= gcol < t_in.  This also kills ragged-tail
    # garbage and the (uninitialized) carry contents at j == 0.
    d = jnp.where((gcol >= freq) & (gcol < t_in), d, 0.0)

    acc_ref[...] += _fold_lane_groups(d)
    carry_ref[...] = x

    @pl.when(j == pl.num_programs(1) - 1)
    def _finalize():
        # Single cross-lane reduce + scale, once per batch tile.
        masep = jnp.sum(acc_ref[...], axis=1, keepdims=True) * inv_count
        # Hoisted divide_no_nan: for a non-negative mask,
        #   divide_no_nan(mask, masep) == mask * where(masep > 0, 1/masep, 0).
        inv_ref[...] = jnp.where(masep > 0.0, 1.0 / masep, 0.0)


def _masep_inv_pallas(insample, freq, b_pad, block_b, tile_bytes, block_t=None):
    t_in = insample.shape[1]
    itemsize = insample.dtype.itemsize

    if block_t is None:
        block_t = max(128, (tile_bytes // (block_b * itemsize)) // 128 * 128)
    block_t = _round_up(block_t, 128)
    block_t = min(block_t, _round_up(t_in, 128))
    if freq > block_t:
        # The single-tile carry needs freq <= block_t (freq < t_in always holds).
        block_t = min(_round_up(freq, 128), _round_up(t_in, 128))

    x = _pad_batch(insample, b_pad)      # zero rows -> masep = 0 -> inv = 0
    nb = b_pad // block_b
    nt = pl.cdiv(t_in, block_t)
    n_valid = t_in - freq

    return pl.pallas_call(
        functools.partial(_masep_inv_kernel, freq=freq, t_in=t_in,
                          block_t=block_t, inv_count=1.0 / float(n_valid)),
        out_shape=jax.ShapeDtypeStruct((b_pad, 1), jnp.float32),
        grid=(nb, nt),
        in_specs=[pl.BlockSpec((block_b, block_t), lambda i, j: (i, j))],
        out_specs=pl.BlockSpec((block_b, 1), lambda i, j: (i, 0)),
        scratch_shapes=[pltpu.VMEM((block_b, 128), jnp.float32),
                        pltpu.VMEM((block_b, block_t), jnp.float32)],
        compiler_params=pltpu.CompilerParams(
            dimension_semantics=("parallel", "arbitrary")),
        cost_estimate=pl.CostEstimate(
            flops=4 * b_pad * t_in,
            transcendentals=0,
            bytes_accessed=b_pad * t_in * itemsize + b_pad * 4),
    )(x)


# ----------------------------------------------------------------------------
# Kernel 2: partial row sums of |target - forecast| * mask * inv_masep
# ----------------------------------------------------------------------------
def _mase_partial_kernel(f_ref, t_ref, m_ref, inv_ref, out_ref, acc_ref, *,
                         t_out, block_t, ragged):
    j = pl.program_id(1)

    @pl.when(j == 0)
    def _init():
        acc_ref[...] = jnp.zeros_like(acc_ref)

    f = f_ref[...].astype(jnp.float32)
    tgt = t_ref[...].astype(jnp.float32)
    m = m_ref[...].astype(jnp.float32)
    inv = inv_ref[...]                         # (block_b, 1) f32, lane-broadcast

    term = jnp.abs(tgt - f) * (m * inv)        # steady state: VPU only
    if ragged:                                 # static: only if T % block_t != 0
        col = j * block_t + lax.broadcasted_iota(jnp.int32, term.shape, 1)
        term = jnp.where(col < t_out, term, 0.0)

    acc_ref[...] += _fold_lane_groups(term)

    @pl.when(j == pl.num_programs(1) - 1)
    def _finalize():
        out_ref[...] = jnp.sum(acc_ref[...], axis=1, keepdims=True)


def mase_loss(insample, freq, forecast, target, mask, *, block_b=None, block_t=None):
    """MASE loss.  `freq` must be a static Python int (as in the PyTorch module)."""
    freq = int(freq)
    B, T = forecast.shape
    assert target.shape == (B, T) and mask.shape == (B, T)
    assert insample.ndim == 2 and insample.shape[0] == B
    assert 0 < freq < insample.shape[1]

    tile_bytes = _tile_byte_budget()

    if block_b is None:
        # >= 2 batch tiles whenever possible so the "parallel" axis can shard
        # across v7x's 2 TensorCores; capped at 256 sublanes.
        block_b = min(256, _round_up(max((B + 1) // 2, 1), 8))
    block_b = _round_up(block_b, 8)
    b_pad = _round_up(B, block_b)

    # (b_pad, 1) per-row reciprocal scale, computed on-device in kernel 1.
    inv_masep = _masep_inv_pallas(insample, freq, b_pad, block_b, tile_bytes,
                                  block_t=block_t)

    itemsize = max(forecast.dtype.itemsize, target.dtype.itemsize,
                   mask.dtype.itemsize)
    if block_t is None:
        block_t = max(128, (tile_bytes // (block_b * itemsize)) // 128 * 128)
    block_t = _round_up(block_t, 128)
    block_t = min(block_t, _round_up(T, 128))

    # Zero batch padding is safe: padded insample rows give inv_masep == 0, so
    # every padded term vanishes.  Time dim is NOT padded; the ragged tail is
    # masked in-kernel.
    f = _pad_batch(forecast, b_pad)
    tg = _pad_batch(target, b_pad)
    m = _pad_batch(mask, b_pad)

    nb = b_pad // block_b
    nt = pl.cdiv(T, block_t)
    ragged = (T % block_t) != 0

    bytes_in = (forecast.dtype.itemsize + target.dtype.itemsize
                + mask.dtype.itemsize) * b_pad * T

    partial_row_sums = pl.pallas_call(
        functools.partial(_mase_partial_kernel, t_out=T, block_t=block_t,
                          ragged=ragged),
        out_shape=jax.ShapeDtypeStruct((b_pad, 1), jnp.float32),
        grid=(nb, nt),
        in_specs=[
            pl.BlockSpec((block_b, block_t), lambda i, j: (i, j)),
            pl.BlockSpec((block_b, block_t), lambda i, j: (i, j)),
            pl.BlockSpec((block_b, block_t), lambda i, j: (i, j)),
            pl.BlockSpec((block_b, 1), lambda i, j: (i, 0)),
        ],
        out_specs=pl.BlockSpec((block_b, 1), lambda i, j: (i, 0)),
        scratch_shapes=[pltpu.VMEM((block_b, 128), jnp.float32)],
        compiler_params=pltpu.CompilerParams(
            dimension_semantics=("parallel", "arbitrary")),
        cost_estimate=pl.CostEstimate(
            flops=5 * b_pad * T,
            transcendentals=0,
            bytes_accessed=bytes_in + 2 * b_pad * 4),
    )(f, tg, m, inv_masep)

    # Trivial XLA combine of the per-batch-tile partial sums; the mean divides
    # by the true (un-padded) element count.
    return jnp.sum(partial_row_sums) / (B * T)


# ----------------------------------------------------------------------------
# Pure-JAX reference (mirrors the PyTorch module exactly).
# ----------------------------------------------------------------------------
def _mase_ref(insample, freq, forecast, target, mask):
    masep = jnp.mean(jnp.abs(insample[:, freq:] - insample[:, :-freq]), axis=1)
    w = mask / masep[:, None]
    w = jnp.where(jnp.isnan(w), 0.0, w)
    w = jnp.where(w == jnp.inf, 0.0, w)
    return jnp.mean(jnp.abs(target - forecast) * w)


if __name__ == "__main__":
    key = jax.random.PRNGKey(0)
    ki, kf, kt, km = jax.random.split(key, 4)

    # Small, deliberately tile-unaligned shapes (ragged time tails on both
    # kernels) so the iota masking, the multi-step reduction, the pl.when
    # init/epilogue and the cross-tile lag carry are all exercised.
    B, T_in, T_out, freq = 8, 200, 250, 3

    insample = jax.random.normal(ki, (B, T_in), dtype=jnp.float32)
    # Constant series -> masep == 0, exercising divide_no_nan (inf/NaN -> 0).
    insample = insample.at[3, :].set(1.0)

    forecast = jax.random.normal(kf, (B, T_out), dtype=jnp.float32)
    target = jax.random.normal(kt, (B, T_out), dtype=jnp.float32)
    mask = (jax.random.uniform(km, (B, T_out)) > 0.2).astype(jnp.float32)
    mask = mask.at[5, :].set(0.0)  # fully-masked series

    ref = _mase_ref(insample, freq, forecast, target, mask)

    # Small explicit tiles: multi-tile time grid + lag carry across tiles.
    loss_small = mase_loss(insample, freq, forecast, target, mask, block_t=128)
    loss_small = jax.block_until_ready(loss_small)
    assert jnp.allclose(loss_small, ref, rtol=1e-4, atol=1e-6), (loss_small, ref)

    # Default (budget-derived) tiles.
    loss = mase_loss(insample, freq, forecast, target, mask)
    loss = jax.block_until_ready(loss)
    assert jnp.allclose(loss, ref, rtol=1e-4, atol=1e-6), (loss, ref)

    print("KERNEL_OK")
</pallas_src>

<mosaic_0001>
module attributes {stable_mosaic.version = 11 : i64} {
  func.func @_masep_inv_kernel(%arg0: i32, %arg1: i32, %arg2: memref<8x128xf32, #tpu.memory_space<vmem>>, %arg3: memref<8x1xf32, #tpu.memory_space<vmem>>, %arg4: memref<8x128xf32, #tpu.memory_space<vmem>>, %arg5: memref<8x128xf32, #tpu.memory_space<vmem>>) attributes {dimension_semantics = [#tpu.dimension_semantics<parallel>, #tpu.dimension_semantics<arbitrary>], iteration_bounds = array<i64: 1, 2>, scalar_prefetch = 0 : i64, scratch_operands = 2 : i64, tpu.core_type = #tpu.core_type<tc>, window_params = [{transform_indices = @transform_0, window_bounds = array<i64: 8, 128>}, {transform_indices = @transform_1, window_bounds = array<i64: 8, 1>}]} {
    %c0_i32 = arith.constant 0 : i32
    %0 = arith.cmpi eq, %arg1, %c0_i32 : i32
    %1 = arith.extui %0 : i1 to i32
    %c0_i32_0 = arith.constant 0 : i32
    %2 = arith.cmpi ne, %1, %c0_i32_0 : i32
    scf.if %2 {
      %cst_14 = arith.constant 0.000000e+00 : f32
      %30 = vector.broadcast %cst_14 : f32 to vector<8x128xf32>
      %c0_15 = arith.constant 0 : index
      %c0_16 = arith.constant 0 : index
      %31 = vector.load %arg4[%c0_15, %c0_16] : memref<8x128xf32, #tpu.memory_space<vmem>>, vector<8x128xf32>
      tpu.vector_store %arg4[%c0_15, %c0_16], %30 {strides = array<i32>} : memref<8x128xf32, #tpu.memory_space<vmem>>, vector<8x128xf32>,
    } else {
    }
    %c0 = arith.constant 0 : index
    %c0_1 = arith.constant 0 : index
    %3 = vector.load %arg2[%c0, %c0_1] : memref<8x128xf32, #tpu.memory_space<vmem>>, vector<8x128xf32>
    %c3_i32 = arith.constant 3 : i32
    %4 = tpu.dynamic_rotate %3 by %c3_i32 dim 1 : vector<8x128xf32>, i32 -> vector<8x128xf32>
    %c0_2 = arith.constant 0 : index
    %c0_3 = arith.constant 0 : index
    %5 = vector.load %arg5[%c0_2, %c0_3] : memref<8x128xf32, #tpu.memory_space<vmem>>, vector<8x128xf32>
    %c3_i32_4 = arith.constant 3 : i32
    %6 = tpu.dynamic_rotate %5 by %c3_i32_4 dim 1 : vector<8x128xf32>, i32 -> vector<8x128xf32>
    %7 = tpu.iota {dimensions = array<i32: 1>} : vector<8x128xi32>
    %c128_i32 = arith.constant 128 : i32
    %8 = arith.muli %arg1, %c128_i32 : i32
    %9 = vector.broadcast %8 : i32 to vector<8x128xi32>
    %10 = arith.addi %9, %7 : vector<8x128xi32>
    %c3_i32_5 = arith.constant 3 : i32
    %11 = vector.broadcast %c3_i32_5 : i32 to vector<8x128xi32>
    %12 = arith.cmpi slt, %7, %11 : vector<8x128xi32>
    %13 = arith.select %12, %6, %4 : vector<8x128xi1>, vector<8x128xf32>
    %14 = arith.subf %3, %13 : vector<8x128xf32>
    %15 = math.absf %14 : vector<8x128xf32>
    %c3_i32_6 = arith.constant 3 : i32
    %16 = vector.broadcast %c3_i32_6 : i32 to vector<8x128xi32>
    %17 = arith.cmpi sge, %10, %16 : vector<8x128xi32>
    %c200_i32 = arith.constant 200 : i32
    %18 = vector.broadcast %c200_i32 : i32 to vector<8x128xi32>
    %19 = arith.cmpi slt, %10, %18 : vector<8x128xi32>
    %20 = arith.andi %17, %19 : vector<8x128xi1>
    %cst = arith.constant 0.000000e+00 : f32
    %21 = vector.broadcast %cst : f32 to vector<8x128xf32>
    %22 = arith.select %20, %15, %21 : vector<8x128xi1>, vector<8x128xf32>
    %c0_7 = arith.constant 0 : index
    %c0_8 = arith.constant 0 : index
    %23 = vector.load %arg4[%c0_7, %c0_8] : memref<8x128xf32, #tpu.memory_space<vmem>>, vector<8x128xf32>
    %24 = arith.addf %23, %22 : vector<8x128xf32>
    %c0_9 = arith.constant 0 : index
    %c0_10 = arith.constant 0 : index
    %25 = vector.load %arg4[%c0_9, %c0_10] : memref<8x128xf32, #tpu.memory_space<vmem>>, vector<8x128xf32>
    tpu.vector_store %arg4[%c0_9, %c0_10], %24 {strides = array<i32>} : memref<8x128xf32, #tpu.memory_space<vmem>>, vector<8x128xf32>,
    %c0_11 = arith.constant 0 : index
    %c0_12 = arith.constant 0 : index
    %26 = vector.load %arg5[%c0_11, %c0_12] : memref<8x128xf32, #tpu.memory_space<vmem>>, vector<8x128xf32>
    tpu.vector_store %arg5[%c0_11, %c0_12], %3 {strides = array<i32>} : memref<8x128xf32, #tpu.memory_space<vmem>>, vector<8x128xf32>,
    %c1_i32 = arith.constant 1 : i32
    %27 = arith.cmpi eq, %arg1, %c1_i32 : i32
    %28 = arith.extui %27 : i1 to i32
    %c0_i32_13 = arith.constant 0 : i32
    %29 = arith.cmpi ne, %28, %c0_i32_13 : i32
    scf.if %29 {
      %c0_14 = arith.constant 0 : index
      %c0_15 = arith.constant 0 : index
      %30 = vector.load %arg4[%c0_14, %c0_15] : memref<8x128xf32, #tpu.memory_space<vmem>>, vector<8x128xf32>
      %cst_16 = arith.constant dense<0.000000e+00> : vector<8xf32>
      %31 = vector.multi_reduction <add>, %30, %cst_16 [1] : vector<8x128xf32> to vector<8xf32>
      %32 = vector.shape_cast %31 : vector<8xf32> to vector<8x1xf32>
      %cst_17 = arith.constant 0.00507614203 : f32
      %33 = vector.broadcast %cst_17 : f32 to vector<8x1xf32>
      %34 = arith.mulf %32, %33 : vector<8x1xf32>
      %cst_18 = arith.constant 0.000000e+00 : f32
      %35 = vector.broadcast %cst_18 : f32 to vector<8x1xf32>
      %36 = arith.cmpf ogt, %34, %35 : vector<8x1xf32>
      %cst_19 = arith.constant 1.000000e+00 : f32
      %37 = vector.broadcast %cst_19 : f32 to vector<8x1xf32>
      %38 = arith.divf %37, %34 : vector<8x1xf32>
      %cst_20 = arith.constant 0.000000e+00 : f32
      %39 = vector.broadcast %cst_20 : f32 to vector<8x1xf32>
      %40 = arith.select %36, %38, %39 : vector<8x1xi1>, vector<8x1xf32>
      %c0_21 = arith.constant 0 : index
      %c0_22 = arith.constant 0 : index
      %41 = vector.load %arg3[%c0_21, %c0_22] : memref<8x1xf32, #tpu.memory_space<vmem>>, vector<8x1xf32>
      tpu.vector_store %arg3[%c0_21, %c0_22], %40 {strides = array<i32>} : memref<8x1xf32, #tpu.memory_space<vmem>>, vector<8x1xf32>,
    } else {
    }
    return
  }
  func.func @transform_0(%arg0: i32, %arg1: i32) -> (i32, i32) {
    %c0_i32 = arith.constant 0 : i32
    return %arg0, %arg1 : i32, i32
  }
  func.func @transform_1(%arg0: i32, %arg1: i32) -> (i32, i32) {
    %c0_i32 = arith.constant 0 : i32
    %c0_i32_0 = arith.constant 0 : i32
    return %arg0, %c0_i32 : i32, i32
  }
}

</mosaic_0001>

<llo_original>
// kernel: tpu_custom_call.1
$region0: #{tpu_custom_call.1}
  #allocation0 [shape = 'u32[]', space=smem, size = 0x4, offset = 0x4, fixed_abs, tag = 'smem constant byte address 0x4 - core index']
  #allocation1 [shape = 'u32[144,128]{1,0:T(1,128)}', space=vmem, size = 0x12000, scoped, tag = 'internal scratch']
  #allocation2 [shape = 'f32[8,128]{1,0:T(8,128)}', space=vmem, size = 0x1000, scoped, tag = 'scratch operand']
  #allocation3 [shape = 'f32[8,128]{1,0:T(8,128)}', space=vmem, size = 0x1000, scoped, tag = 'scratch operand']
  %s0 = inlined_call_operand.hbm [shape: f32[8,200], index: 0, kind: input, shape index: {}]
  %s1 = inlined_call_operand.vmem [shape: f32[8,1], index: 1, kind: output, shape index: {}]
  %s2 = sld [smem:[#allocation0]]
  $region49: #{tpu_custom_call.1} parent=0
    _
  %s4 = ssub.s32 1, %s2
  %s5 = scalar_select 0, %s4, %s2
  $region1: #{tpu_custom_call.1} parent=0
    #allocation4 [shape = 'u8[8192]{0}', space=vmem, size = 0x2000, scoped, tag = 'input window, operand 0']
    #allocation5 [shape = 's32[2]{0}', space=sflag, size = 0x8, scoped, tag = 'scoped memory for tpu_custom_call.1']
    %6 = vsyncpa [#allocation5], 0
    %s7 = scalar_lea.sflag [#allocation5], 1
    %8 = vsyncpa %s7, 0
    loop: start=0, step=1, limit=4
    $region2: #{tpu_custom_call.1} parent=1 // loop_pre_header
      _
    $region3: #{tpu_custom_call.1} parent=1 // loop_header
      %s10 = sphi 0, %s14
      %p11 = scmp.ge.s32.totalorder %s10, 4
      %s17 = sphi 0, %s29
      %s18 = sphi 0, %s25
      %s19 = sphi 0, %s17
      %s20 = sphi 0, %s18
      %s21 = sphi 0, %s19
      %s22 = sphi 0, %s20
      %s34 = sphi 0, %s36
      %s37 = sphi 0, %s34
      %s38 = sphi 0, %s37
      %s54 = sphi 0, %s38
      %s60 = sphi 0, %s62
      %s63 = sphi 0, %s60
      %s64 = sphi 0, %s63
      %s80 = sphi 0, %s64
    $region4: #{tpu_custom_call.1} parent=1 // loop_header_branch
      %13 = sbr.rel (%p11) target = $region8
    $region5: #{tpu_custom_call.1} parent=1 // loop_body
      %s15 = ssub.s32 %s10, 1
      %s16 = ssub.s32 %s10, 2
      %s23 = sadd.s32 1, %s18
      %p24 = scmp.ge.s32.totalorder %s23, 2
      %s25 = scalar_select %p24, 0, %s23
      %s26 = sadd.s32 1, %s17
      %s27 = scalar_select %p24, %s26, %s17
      %p28 = scmp.ge.s32.totalorder %s27, 1
      %s29 = scalar_select %p28, 0, %s27
      %s30 = ssub.s32 %s17, %s29
      %s31 = ssub.s32 %s18, %s25
      %s32 = sor.u32 %s30, %s31
      %p33 = scmp.eq.s32.totalorder %s32, 0
      %s35 = sadd.s32 %s34, 1
      %s36 = scalar_select %p33, %s34, %s35
      %p39 = pneg %p33
      %p40 = scmp.eq.s32.totalorder %s10, 1
      %p41 = por %p39, %p40
      %p42 = scmp.ne.s32.totalorder %s34, %s37
      %p43 = scmp.eq.s32.totalorder %s10, 0
      %p44 = por %p42, %p43
      %p45 = scmp.ne.s32.totalorder %s34, %s37
      %p46 = scmp.eq.s32.totalorder %s15, 1
      %p47 = por %p45, %p46
      %p48 = scmp.ne.s32.totalorder %s37, %s38
      %p49 = scmp.eq.s32.totalorder %s15, 0
      %p50 = por %p48, %p49
      %p51 = scmp.ne.s32.totalorder %s37, %s38
      %p52 = scmp.eq.s32.totalorder %s16, 1
      %p53 = por %p51, %p52
      %p55 = scmp.ne.s32.totalorder %s38, %s54
      %p56 = scmp.eq.s32.totalorder %s16, 0
      %p57 = por %p55, %p56
      %s58 = ssub.s32 %s17, %s29
      %p59 = scmp.eq.s32.totalorder %s58, 0
      %s61 = sadd.s32 %s60, 1
      %s62 = scalar_select %p59, %s60, %s61
      %p65 = pneg %p59
      %p66 = scmp.eq.s32.totalorder %s10, 1
      %p67 = por %p65, %p66
      %p68 = scmp.ne.s32.totalorder %s60, %s63
      %p69 = scmp.eq.s32.totalorder %s10, 0
      %p70 = por %p68, %p69
      %p71 = scmp.ne.s32.totalorder %s60, %s63
      %p72 = scmp.eq.s32.totalorder %s15, 1
      %p73 = por %p71, %p72
      %p74 = scmp.ne.s32.totalorder %s63, %s64
      %p75 = scmp.eq.s32.totalorder %s15, 0
      %p76 = por %p74, %p75
      %p77 = scmp.ne.s32.totalorder %s63, %s64
      %p78 = scmp.eq.s32.totalorder %s16, 1
      %p79 = por %p77, %p78
      %p81 = scmp.ne.s32.totalorder %s64, %s80
      %p82 = scmp.eq.s32.totalorder %s16, 0
      %p83 = por %p81, %p82
      %p84 = scmp.le.s32.totalorder 1, %s10
      %p85 = scmp.lt.s32.totalorder %s10, 3
      %p86 = pnand %p84, %p85
      %p87 = pneg %p86
      // Predicated region
      $region9: #{tpu_custom_call.1} parent=5 // pred_check
        _
      $region10: #{tpu_custom_call.1} parent=5 // pred_check_branch
        %89 = sbr.rel (%p86) target = $region12
      $region11: #{tpu_custom_call.1} parent=5 // pred_region
        %s90 = ssub.s32 %s10, 1
      $region12: #{tpu_custom_call.1} parent=5 // pred_fallthru
        _
      %p91 = scmp.lt.s32.totalorder %s10, 2
      // Predicated region
      $region13: #{tpu_custom_call.1} parent=5 // pred_check
        %p92 = pneg %p91
      $region14: #{tpu_custom_call.1} parent=5 // pred_check_branch
        %94 = sbr.rel (%p92) target = $region16
      $region15: #{tpu_custom_call.1} parent=5 // pred_region
        // Predicated region
        $region17: #{tpu_custom_call.1} parent=15 // pred_check
          %p95 = pneg %p44
        $region18: #{tpu_custom_call.1} parent=15 // pred_check_branch
          %97 = sbr.rel (%p95) target = $region20
        $region19: #{tpu_custom_call.1} parent=15 // pred_region
          %s98 = sand.u32 %s34, 1
          %s99 = scalar_lea.sflag [#allocation5], %s98
          %s100 = sand.u32 %s34, 1
          %s101 = smul.addr %s100, 8
          %s102 = scalar_lea.vmem [#allocation4], %s101
          %s104 = ssub.s32 128, 128
          %105 = vsyncadd %s99, %s104
          %s106 = smul.addr %s17, 2
          %s107 = sadd.s32 %s18, %s106
          %s108 = smul.addr %s107, 128
          %s109 = scalar_lea.hbm %s0, %s108
          %s111 = sshll.u32 %s102, 4
          %s112 = int_to_ptr.vmem [resolvable:$true] %s111
          %114 = dma.hbm_to_vmem [thread:$0]  %s109, 128, %s112, %s99
        $region20: #{tpu_custom_call.1} parent=15 // pred_fallthru
          _
      $region16: #{tpu_custom_call.1} parent=5 // pred_fallthru
        _
      %p115 = scmp.le.s32.totalorder 1, %s10
      %p116 = scmp.lt.s32.totalorder %s10, 3
      %p117 = pnand %p115, %p116
      %p118 = pneg %p117
      // Predicated region
      $region21: #{tpu_custom_call.1} parent=5 // pred_check
        _
      $region22: #{tpu_custom_call.1} parent=5 // pred_check_branch
        %120 = sbr.rel (%p117) target = $region24
      $region23: #{tpu_custom_call.1} parent=5 // pred_region
        %s121 = ssub.s32 %s10, 1
        %s122 = sand.u32 %s37, 1
        %s123 = scalar_lea.sflag [#allocation5], %s122
        %s124 = sand.u32 %s37, 1
        %s125 = smul.addr %s124, 8
        %s126 = scalar_lea.vmem [#allocation4], %s125
        // Predicated region
        $region25: #{tpu_custom_call.1} parent=23 // pred_check
          %p127 = pneg %p50
        $region26: #{tpu_custom_call.1} parent=23 // pred_check_branch
          %129 = sbr.rel (%p127) target = $region28
        $region27: #{tpu_custom_call.1} parent=23 // pred_region
          %130 = dma.done %s123, 128
        $region28: #{tpu_custom_call.1} parent=23 // pred_fallthru
          _
        %s131 = sand.u32 %s37, 1
        %s132 = scalar_lea.sflag [#allocation5], %s131
        %s133 = sand.u32 %s37, 1
        %s134 = smul.addr %s133, 8
        %s135 = scalar_lea.vmem [#allocation4], %s134
        %p136 = pneg %p50
        %p137 = pneg %p47
        %p138 = pneg %p76
        %p139 = pneg %p73
        %p140 = scmp.lt.s32.totalorder %s19, 0
        %s141 = scalar_select %p140, %s19, 0
        %s142 = smul.addr %s141, 8
        %s143 = scalar_lea.vmem %s1, %s142
        %p144 = scmp.lt.s32.totalorder %s19, 0
        %s145 = scalar_select %p144, %s19, 0
        %s146 = smul.addr %s145, 8
        %s147 = scalar_lea.vmem %s1, %s146
        %p148 = scmp.eq.s32.totalorder %s20, 0
        // Predicated region
        $region29: #{tpu_custom_call.1} parent=23 // pred_check
          %p149 = pneg %p148
        $region30: #{tpu_custom_call.1} parent=23 // pred_check_branch
          %151 = sbr.rel (%p149) target = $region32
        $region31: #{tpu_custom_call.1} parent=23 // pred_region
          %152 = vst [vmem:[#allocation2] sm:$0xff] 0.0
        $region32: #{tpu_custom_call.1} parent=23 // pred_fallthru
          _
        %v153 = vld [vmem:[%s126] sm:$0xff]
        %154 = vrot.lane.b32.xlu0 %v153, 3
        %v155 = vpop.permute.xlu0 %154
        %v156 = vld [vmem:[#allocation3] sm:$0xff]
        %157 = vrot.lane.b32.xlu0 %v156, 3
        %v158 = vpop.permute.xlu0 %157
        %v159 = vlaneseq
        %v160 = vand.u32 %v159, 127
        %s161 = smul.u32 %s20, 128
        %v162 = vstv %s161
        %v163 = vadd.s32 %v162, %v160
        %vm164 = vcmp.lt.s32.totalorder %v160, 3
        %v165 = vsel %vm164, %v158, %v155
        %v166 = vsub.f32 %v153, %v165
        %v167 = vand.u32 2147483647, %v166
        %vm168 = vcmp.ge.s32.totalorder %v163, 3
        %vm169 = vcmp.lt.s32.totalorder %v163, 200
        %vm170 = vmand %vm168, %vm169
        %v171 = vsel %vm170, %v167, 0.0
        %v172 = vld [vmem:[#allocation2] sm:$0xff]
        %v173 = vadd.f32 %v172, %v171
        %174 = vst [vmem:[#allocation2] sm:$0xff] %v173
        %175 = vst [vmem:[#allocation3] sm:$0xff] %v153
        %p176 = scmp.eq.s32.totalorder %s20, 1
        // Predicated region
        $region33: #{tpu_custom_call.1} parent=23 // pred_check
          %p177 = pneg %p176
        $region34: #{tpu_custom_call.1} parent=23 // pred_check_branch
          %179 = sbr.rel (%p177) target = $region36
        $region35: #{tpu_custom_call.1} parent=23 // pred_region
          %v180 = vld [vmem:[#allocation2] sm:$0xff]
          %181 = vadd.xlane.f32.xlu0 %v180
          %v182 = vpop.xlane.xlu0 %181
          %v183 = vmul.f32 %v182, 0.005076142
          %vm184 = vcmp.gt.f32.partialorder %v183, 0.0
          %v185 = vrcp.pop %v183
          %v186 = vmul.f32 1.0, %v185
          %v187 = vsel %vm184, %v186, 0.0
          %vm188 = vcmask 7168
          %189 = vst.msk [vmem:[%s147] sm:$0xff] %vm188, %v187
        $region36: #{tpu_custom_call.1} parent=23 // pred_fallthru
          _
        %p190 = scmp.lt.s32.totalorder %s19, 0
        %s191 = scalar_select %p190, %s19, 0
        %s192 = smul.addr %s191, 8
        %s193 = scalar_lea.vmem %s1, %s192
        // Predicated region
        $region37: #{tpu_custom_call.1} parent=23 // pred_check
          %p194 = pneg %p73
        $region38: #{tpu_custom_call.1} parent=23 // pred_check_branch
          %196 = sbr.rel (%p194) target = $region40
        $region39: #{tpu_custom_call.1} parent=23 // pred_region
          _
        $region40: #{tpu_custom_call.1} parent=23 // pred_fallthru
          _
        // Predicated region
        $region41: #{tpu_custom_call.1} parent=23 // pred_check
          %p197 = pneg %p73
        $region42: #{tpu_custom_call.1} parent=23 // pred_check_branch
          %199 = sbr.rel (%p197) target = $region44
        $region43: #{tpu_custom_call.1} parent=23 // pred_region
          %p200 = scmp.lt.s32.totalorder %s19, 0
          %s201 = scalar_select %p200, %s19, 0
          %s202 = smul.addr %s201, 8
          %s203 = scalar_lea.vmem %s1, %s202
        $region44: #{tpu_custom_call.1} parent=23 // pred_fallthru
          _
      $region24: #{tpu_custom_call.1} parent=5 // pred_fallthru
        _
      %p204 = scmp.le.s32.totalorder 2, %s10
      // Predicated region
      $region45: #{tpu_custom_call.1} parent=5 // pred_check
        %p205 = pneg %p204
      $region46: #{tpu_custom_call.1} parent=5 // pred_check_branch
        %207 = sbr.rel (%p205) target = $region48
      $region47: #{tpu_custom_call.1} parent=5 // pred_region
        %s208 = ssub.s32 %s10, 2
      $region48: #{tpu_custom_call.1} parent=5 // pred_fallthru
        _
    $region6: #{tpu_custom_call.1} parent=1 // loop_footer
      %s14 = sadd.s32 1, %s10
    $region7: #{tpu_custom_call.1} parent=1 // loop_footer_branch
      %9 = sbr.rel target = $region3
    $region8: #{tpu_custom_call.1} parent=1 // loop_exit
      _
    %209 = vsyncpa [#allocation5], 1
    %s210 = scalar_lea.sflag [#allocation5], 1
    %211 = vsyncpa %s210, 1

</llo_original>
